<compile_context>
chip_gen: v6e
topology: v6e:2x2x1
jax: 0.10.0
libtpu: 0.0.40
codegen_flags: <defaults>
</compile_context>

<pallas_src>
import functools

import jax
import jax.numpy as jnp
from jax.experimental import pallas as pl
from jax.experimental.pallas import tpu as pltpu

SELU_ALPHA = 1.6732632423543772
SELU_SCALE = 1.0507009873554805

_VMEM_LIMIT = 32 * 1024 * 1024  # <= default scoped limit on v6e/v7x, raises v5e's


def _round_up(x, m):
    return (x + m - 1) // m * m


# ---------------------------------------------------------------------------
# Kernel 1: fused (all kernel sizes) Conv1d(valid) + SELU + AdaptiveMaxPool1d(1)
#   Inputs are the pre-built im2col slab and pre-transposed/padded weights, so
#   the body is matmul + bias + SELU + running max only.
# ---------------------------------------------------------------------------
def _conv_selu_maxpool_kernel(slab_ref, w_ref, b_ref, lout_ref, o_ref, *,
                              tail_start):
    # slab_ref: (Bp, block_t, KDp) bf16  im2col windows for this Lout tile
    # w_ref:    (KDp, block_c)     bf16  im2col conv weights for this C tile
    # b_ref:    (1, block_c)       f32   conv bias
    # lout_ref: (1, block_c)       i32   valid conv-output length per column
    # o_ref:    (Bp, block_c)      bf16  running max (resident over the L axis)
    l_idx = pl.program_id(1)
    Bp, T, KDp = slab_ref.shape
    C = o_ref.shape[-1]

    # Single 2-D MXU contraction over the padded Kmax*D axis, f32 accumulation.
    x2 = slab_ref[...].reshape(Bp * T, KDp)
    acc = jnp.dot(x2, w_ref[...], preferred_element_type=jnp.float32)
    acc = acc.reshape(Bp, T, C) + b_ref[0, :]

    # SELU (clamp the exp argument so the inactive branch never overflows).
    selu = SELU_SCALE * jnp.where(
        acc > 0.0, acc, SELU_ALPHA * (jnp.exp(jnp.minimum(acc, 0.0)) - 1.0))

    # Output-resident running max across the Lout ("arbitrary") grid axis.
    @pl.when(l_idx == 0)
    def _():
        o_ref[...] = jnp.full(o_ref.shape, -jnp.inf, o_ref.dtype)

    # Interior tiles: every position is valid for every column -> plain max.
    @pl.when(l_idx < tail_start)
    def _():
        o_ref[...] = jnp.maximum(o_ref[...],
                                 jnp.max(selu, axis=1).astype(o_ref.dtype))

    # Tail tiles: mask positions past each column's own conv-output length
    # (different kernel sizes -> different valid lengths; also masks L padding).
    @pl.when(l_idx >= tail_start)
    def _():
        pos = l_idx * T + jax.lax.broadcasted_iota(jnp.int32, (T, C), 0)
        valid = pos < lout_ref[0, :]
        tile_max = jnp.max(jnp.where(valid[None, :, :], selu, -jnp.inf), axis=1)
        o_ref[...] = jnp.maximum(o_ref[...], tile_max.astype(o_ref.dtype))


def conv_selu_maxpool(slab, w_all, b_all, lout_cols, *, block_t, block_c,
                      tail_start):
    """slab: (Bp, Lpad, KDp); w_all: (KDp, Cpad); b_all/lout_cols: (1, Cpad)."""
    Bp, Lpad, KDp = slab.shape
    KDp2, Cpad = w_all.shape
    assert KDp == KDp2 and Cpad % block_c == 0 and Lpad % block_t == 0
    n_c = Cpad // block_c
    n_l = Lpad // block_t

    kern = functools.partial(_conv_selu_maxpool_kernel, tail_start=tail_start)
    return pl.pallas_call(
        kern,
        out_shape=jax.ShapeDtypeStruct((Bp, Cpad), slab.dtype),
        grid_spec=pltpu.PrefetchScalarGridSpec(
            num_scalar_prefetch=0,
            grid=(n_c, n_l),
            in_specs=[
                pl.BlockSpec((Bp, block_t, KDp), lambda c, l: (0, l, 0)),
                pl.BlockSpec((KDp, block_c), lambda c, l: (0, c)),
                pl.BlockSpec((1, block_c), lambda c, l: (0, c)),
                pl.BlockSpec((1, block_c), lambda c, l: (0, c)),
            ],
            out_specs=pl.BlockSpec((Bp, block_c), lambda c, l: (0, c)),
        ),
        compiler_params=pltpu.CompilerParams(
            dimension_semantics=("parallel", "arbitrary"),
            vmem_limit_bytes=_VMEM_LIMIT),
    )(slab, w_all, b_all, lout_cols)


# ---------------------------------------------------------------------------
# Kernel 2: Linear classifier, tiled over lane-dense n_classes tiles
# ---------------------------------------------------------------------------
def _linear_kernel(x_ref, w_ref, b_ref, o_ref):
    # x_ref: (Bp, F) bf16 pooled features (already compute dtype, no cast here)
    # w_ref: (F, block_n) bf16; b_ref: (1, block_n) f32; o_ref: (Bp, block_n) f32
    out = jnp.dot(x_ref[...], w_ref[...], preferred_element_type=jnp.float32)
    o_ref[...] = out + b_ref[...]


def linear(x, w, b, *, block_n):
    Bp, F = x.shape
    F2, Npad = w.shape
    assert F == F2 and Npad % block_n == 0
    n_n = Npad // block_n
    return pl.pallas_call(
        _linear_kernel,
        out_shape=jax.ShapeDtypeStruct((Bp, Npad), jnp.float32),
        grid_spec=pltpu.PrefetchScalarGridSpec(
            num_scalar_prefetch=0,
            grid=(n_n,),
            in_specs=[
                pl.BlockSpec((Bp, F), lambda j: (0, 0)),
                pl.BlockSpec((F, block_n), lambda j: (0, j)),
                pl.BlockSpec((1, block_n), lambda j: (0, j)),
            ],
            out_specs=pl.BlockSpec((Bp, block_n), lambda j: (0, j)),
        ),
        compiler_params=pltpu.CompilerParams(
            dimension_semantics=("parallel",),
            vmem_limit_bytes=_VMEM_LIMIT),
    )(x, w, b)


# ---------------------------------------------------------------------------
# Parameter prep: pre-transpose / pad PyTorch-layout weights for the kernels
# ---------------------------------------------------------------------------
def prepare_params(raw, *, compute_dtype=jnp.bfloat16, block_c=256,
                   block_n=512):
    emb = raw['embedding']                                   # (V, D) f32
    convs = raw['convs']                                     # [((C,D,K),(C,))]
    kernel_sizes = [int(w.shape[-1]) for w, _ in convs]
    n_filters = int(convs[0][0].shape[0])
    D = int(emb.shape[1])
    kmax = max(kernel_sizes)
    c_total = n_filters * len(convs)

    # Filter tiling: 256-wide targets v6e/v7x's 256x256 MXU; cap for tiny models.
    block_c = min(block_c, _round_up(c_total, 128))
    c_pad = _round_up(c_total, block_c)

    # Contraction dim padded to a lane multiple -> unmasked loads, full K pass.
    kd = kmax * D
    kd_pad = _round_up(kd, 128)

    # im2col weight slab (kd_pad, c_pad); taps beyond K, padded rows/cols are 0.
    w_cols, b_cols = [], []
    for w, b in convs:
        K = int(w.shape[-1])
        wt = jnp.transpose(w, (2, 1, 0))                     # (K, D, C)
        wt = jnp.pad(wt, ((0, kmax - K), (0, 0), (0, 0)))    # (Kmax, D, C)
        w_cols.append(wt.reshape(kd, n_filters))
        b_cols.append(b)
    w_all = jnp.concatenate(w_cols, axis=1)                  # (Kmax*D, Ctot)
    w_all = jnp.pad(w_all, ((0, kd_pad - kd), (0, c_pad - c_total)))
    b_all = jnp.pad(jnp.concatenate(b_cols), (0, c_pad - c_total))

    # Classifier: (n_classes, F) -> pre-transposed, padded (c_pad, n_pad).
    cls_w, cls_b = raw['cls_w'], raw['cls_b']
    n_classes = int(cls_w.shape[0])
    block_n = min(block_n, _round_up(n_classes, 128))
    n_pad = _round_up(n_classes, block_n)
    w2 = jnp.pad(cls_w.T, ((0, c_pad - c_total), (0, n_pad - n_classes)))
    b2 = jnp.pad(cls_b, (0, n_pad - n_classes))

    return dict(
        embedding=emb,
        w_all=w_all.astype(compute_dtype),
        b_all=b_all.reshape(1, c_pad).astype(jnp.float32),
        cls_w=w2.astype(compute_dtype),
        cls_b=b2.reshape(1, n_pad).astype(jnp.float32),
        kernel_sizes=kernel_sizes, kmax=kmax, n_filters=n_filters,
        encoding_dim=D, c_total=c_total, c_pad=c_pad, kd_pad=kd_pad,
        n_classes=n_classes, block_c=block_c, block_n=block_n,
        compute_dtype=compute_dtype,
    )


# ---------------------------------------------------------------------------
# DeepNOG forward (embedding + im2col in plain JAX, hot paths in Pallas)
# ---------------------------------------------------------------------------
def deepnog_forward(seq_ids, prep, *, block_t=128):
    """seq_ids: (B, L) int token ids. Returns (B, n_classes) logits."""
    B, L = seq_ids.shape
    kmax = prep['kmax']
    D = prep['encoding_dim']
    assert L >= kmax, "sequence shorter than the largest conv kernel"

    kmin = min(prep['kernel_sizes'])
    lout_max = L - kmin + 1          # longest valid conv output (smallest K)
    lout_min = L - kmax + 1          # shortest valid conv output (largest K)

    bt = min(block_t, _round_up(lout_max, 16))   # multiple of 16 (bf16 sublane)
    n_l = pl.cdiv(lout_max, bt)
    lout_pad = n_l * bt
    tail_start = lout_min // bt      # static: first L tile that needs masking

    # Pad batch to a sublane multiple so the matmul M dim / vregs are filled.
    b_pad = _round_up(max(B, 8), 8)

    # Embedding lookup (plain JAX; tiny gather) + batch/length zero padding.
    x_emb = prep['embedding'][seq_ids].astype(prep['compute_dtype'])  # (B,L,D)
    l_need = lout_pad + kmax - 1
    x_emb = jnp.pad(x_emb, ((0, b_pad - B), (0, l_need - L), (0, 0)))

    # im2col slab built ONCE by XLA: (Bp, Lout_pad, Kmax*D), zero-padded to KDp.
    kd = kmax * D
    slab = jnp.concatenate(
        [x_emb[:, k:k + lout_pad, :] for k in range(kmax)], axis=-1)
    slab = jnp.pad(slab, ((0, 0), (0, 0), (0, prep['kd_pad'] - kd)))

    # Per-column valid conv-output lengths. Padded filter columns get lout_max
    # so they pool to SELU(0)=0 (their weights/bias are zero); padded classifier
    # rows are zero, so no slicing is needed between the two kernels.
    louts = jnp.concatenate(
        [jnp.full((prep['n_filters'],), L - k + 1, jnp.int32)
         for k in prep['kernel_sizes']])
    louts = jnp.pad(louts, (0, prep['c_pad'] - prep['c_total']),
                    constant_values=lout_max).reshape(1, prep['c_pad'])

    feats = conv_selu_maxpool(slab, prep['w_all'], prep['b_all'], louts,
                              block_t=bt, block_c=prep['block_c'],
                              tail_start=tail_start)
    # Dropout: identity at inference time.
    logits = linear(feats, prep['cls_w'], prep['cls_b'],
                    block_n=prep['block_n'])
    return logits[:B, :prep['n_classes']]


# ---------------------------------------------------------------------------
# PyTorch-equivalent parameter init (f32, PyTorch layouts)
# ---------------------------------------------------------------------------
def init_raw_params(key, *, vocab_size, encoding_dim, kernel_sizes, n_filters,
                    n_classes):
    keys = jax.random.split(key, 3 + 2 * len(kernel_sizes))
    raw = {'embedding': jax.random.normal(
        keys[0], (vocab_size, encoding_dim), jnp.float32)}    # nn.Embedding N(0,1)
    convs = []
    for i, K in enumerate(kernel_sizes):
        kw, kb = keys[1 + 2 * i], keys[2 + 2 * i]
        w = jax.random.normal(kw, (n_filters, encoding_dim, K),
                              jnp.float32) * jnp.sqrt(1.0 / K)  # DeepNOG init
        bound = 1.0 / jnp.sqrt(encoding_dim * K)                # Conv1d bias init
        b = jax.random.uniform(kb, (n_filters,), jnp.float32, -bound, bound)
        convs.append((w, b))
    raw['convs'] = convs
    in_features = n_filters * len(kernel_sizes)
    kw, kb = keys[-2], keys[-1]
    bound = 1.0 / jnp.sqrt(in_features)
    raw['cls_w'] = jax.random.uniform(kw, (n_classes, in_features),
                                      jnp.float32, -bound, bound)
    raw['cls_b'] = jax.random.uniform(kb, (n_classes,), jnp.float32,
                                      -bound, bound)
    return raw


if __name__ == "__main__":
    # Small, module-consistent shapes.
    B, L = 2, 32
    vocab_size = 27              # len(amino-acid vocab)//2 + 1
    encoding_dim = 8
    kernel_sizes = [3, 5]
    n_filters = 16
    n_classes = 10

    key = jax.random.PRNGKey(0)
    k_param, k_seq = jax.random.split(key)
    raw = init_raw_params(k_param, vocab_size=vocab_size,
                          encoding_dim=encoding_dim,
                          kernel_sizes=kernel_sizes, n_filters=n_filters,
                          n_classes=n_classes)
    seq_ids = jax.random.randint(k_seq, (B, L), 0, vocab_size, jnp.int32)

    cdt = jnp.bfloat16
    prep = prepare_params(raw, compute_dtype=cdt)
    logits = deepnog_forward(seq_ids, prep)
    logits = jax.block_until_ready(logits)
    assert logits.shape == (B, n_classes)
    assert bool(jnp.all(jnp.isfinite(logits)))

    # Pure-JAX reference with the SAME bf16 operand rounding (f32 accumulation)
    # so the comparison isolates structural correctness.
    def qf(a):
        return a.astype(cdt).astype(jnp.float32)

    x_emb_ref = qf(raw['embedding'])[seq_ids]
    pooled = []
    for (w, b), K in zip(raw['convs'], kernel_sizes):
        Lout = L - K + 1
        wq = qf(w)
        acc = jnp.zeros((B, Lout, n_filters), jnp.float32)
        for k in range(K):
            acc = acc + jnp.einsum('bld,cd->blc', x_emb_ref[:, k:k + Lout, :],
                                   wq[:, :, k],
                                   preferred_element_type=jnp.float32)
        acc = acc + b[None, None, :]
        selu = SELU_SCALE * jnp.where(
            acc > 0, acc, SELU_ALPHA * (jnp.exp(jnp.minimum(acc, 0.0)) - 1.0))
        pooled.append(jnp.max(selu, axis=1))
    feats_ref = jnp.concatenate(pooled, axis=1)
    ref_logits = qf(feats_ref) @ qf(raw['cls_w']).T + raw['cls_b'][None, :]

    max_err = float(jnp.max(jnp.abs(logits - ref_logits)))
    assert max_err < 1e-2, f"max abs error {max_err}"

    print("KERNEL_OK")
</pallas_src>

<mosaic_0001>
module attributes {stable_mosaic.version = 11 : i64} {
  func.func @_conv_selu_maxpool_kernel(%arg0: i32, %arg1: i32, %arg2: memref<8x32x128xbf16, #tpu.memory_space<vmem>>, %arg3: memref<128x128xbf16, #tpu.memory_space<vmem>>, %arg4: memref<1x128xf32, #tpu.memory_space<vmem>>, %arg5: memref<1x128xi32, #tpu.memory_space<vmem>>, %arg6: memref<8x128xbf16, #tpu.memory_space<vmem>>) attributes {dimension_semantics = [#tpu.dimension_semantics<parallel>, #tpu.dimension_semantics<arbitrary>], iteration_bounds = array<i64: 1, 1>, scalar_prefetch = 0 : i64, scratch_operands = 0 : i64, tpu.core_type = #tpu.core_type<tc>, window_params = [{transform_indices = @transform_0, window_bounds = array<i64: 8, 32, 128>}, {transform_indices = @transform_1, window_bounds = array<i64: 128, 128>}, {transform_indices = @transform_2, window_bounds = array<i64: 1, 128>}, {transform_indices = @transform_3, window_bounds = array<i64: 1, 128>}, {transform_indices = @transform_4, window_bounds = array<i64: 8, 128>}]} {
    %c0 = arith.constant 0 : index
    %c0_0 = arith.constant 0 : index
    %c0_1 = arith.constant 0 : index
    %0 = vector.load %arg2[%c0, %c0_0, %c0_1] : memref<8x32x128xbf16, #tpu.memory_space<vmem>>, vector<8x32x128xbf16>
    %1 = vector.shape_cast %0 : vector<8x32x128xbf16> to vector<256x128xbf16>
    %c0_2 = arith.constant 0 : index
    %c0_3 = arith.constant 0 : index
    %2 = vector.load %arg3[%c0_2, %c0_3] : memref<128x128xbf16, #tpu.memory_space<vmem>>, vector<128x128xbf16>
    %cst = arith.constant dense<0.000000e+00> : vector<256x128xf32>
    %3 = tpu.matmul %1, %2, %cst {dimension_numbers = #tpu.dot_dimension_numbers<[1], [0], [0], [1], [0, 0, 1, 1], [], []>} : vector<256x128xbf16>, vector<128x128xbf16>, vector<256x128xf32> -> vector<256x128xf32>
    %4 = vector.shape_cast %3 : vector<256x128xf32> to vector<8x32x128xf32>
    %c0_4 = arith.constant 0 : index
    %c0_5 = arith.constant 0 : index
    %5 = vector.load %arg4[%c0_4, %c0_5] : memref<1x128xf32, #tpu.memory_space<vmem>>, vector<1x128xf32>
    %6 = vector.shape_cast %5 : vector<1x128xf32> to vector<128xf32>
    %7 = vector.shape_cast %6 : vector<128xf32> to vector<1x1x128xf32>
    %8 = vector.broadcast %7 : vector<1x1x128xf32> to vector<8x32x128xf32>
    %9 = arith.addf %4, %8 : vector<8x32x128xf32>
    %cst_6 = arith.constant 0.000000e+00 : f32
    %10 = vector.broadcast %cst_6 : f32 to vector<8x32x128xf32>
    %11 = arith.cmpf ogt, %9, %10 : vector<8x32x128xf32>
    %cst_7 = arith.constant 0.000000e+00 : f32
    %12 = vector.broadcast %cst_7 : f32 to vector<8x32x128xf32>
    %13 = arith.minimumf %9, %12 : vector<8x32x128xf32>
    %14 = math.exp %13 : vector<8x32x128xf32>
    %cst_8 = arith.constant 1.000000e+00 : f32
    %15 = vector.broadcast %cst_8 : f32 to vector<8x32x128xf32>
    %16 = arith.subf %14, %15 : vector<8x32x128xf32>
    %cst_9 = arith.constant 1.67326319 : f32
    %17 = vector.broadcast %cst_9 : f32 to vector<8x32x128xf32>
    %18 = arith.mulf %17, %16 : vector<8x32x128xf32>
    %19 = arith.select %11, %9, %18 : vector<8x32x128xi1>, vector<8x32x128xf32>
    %cst_10 = arith.constant 1.05070102 : f32
    %20 = vector.broadcast %cst_10 : f32 to vector<8x32x128xf32>
    %21 = arith.mulf %20, %19 : vector<8x32x128xf32>
    %c0_i32 = arith.constant 0 : i32
    %22 = arith.cmpi eq, %arg1, %c0_i32 : i32
    %23 = arith.extui %22 : i1 to i32
    %c0_i32_11 = arith.constant 0 : i32
    %24 = arith.cmpi ne, %23, %c0_i32_11 : i32
    scf.if %24 {
      %cst_16 = arith.constant 0xFF80 : bf16
      %31 = vector.broadcast %cst_16 : bf16 to vector<8x128xbf16>
      %c0_17 = arith.constant 0 : index
      %c0_18 = arith.constant 0 : index
      %32 = vector.load %arg6[%c0_17, %c0_18] : memref<8x128xbf16, #tpu.memory_space<vmem>>, vector<8x128xbf16>
      tpu.vector_store %arg6[%c0_17, %c0_18], %31 {strides = array<i32>} : memref<8x128xbf16, #tpu.memory_space<vmem>>, vector<8x128xbf16>,
    } else {
    }
    %c0_i32_12 = arith.constant 0 : i32
    %25 = arith.cmpi slt, %arg1, %c0_i32_12 : i32
    %26 = arith.extui %25 : i1 to i32
    %c0_i32_13 = arith.constant 0 : i32
    %27 = arith.cmpi ne, %26, %c0_i32_13 : i32
    scf.if %27 {
      %c0_16 = arith.constant 0 : index
      %c0_17 = arith.constant 0 : index
      %31 = vector.load %arg6[%c0_16, %c0_17] : memref<8x128xbf16, #tpu.memory_space<vmem>>, vector<8x128xbf16>
      %cst_18 = arith.constant dense<0xFF800000> : vector<8x128xf32>
      %32 = vector.multi_reduction <maximumf>, %21, %cst_18 [1] : vector<8x32x128xf32> to vector<8x128xf32>
      %33 = arith.truncf %32 : vector<8x128xf32> to vector<8x128xbf16>
      %34 = arith.maximumf %31, %33 : vector<8x128xbf16>
      %c0_19 = arith.constant 0 : index
      %c0_20 = arith.constant 0 : index
      %35 = vector.load %arg6[%c0_19, %c0_20] : memref<8x128xbf16, #tpu.memory_space<vmem>>, vector<8x128xbf16>
      tpu.vector_store %arg6[%c0_19, %c0_20], %34 {strides = array<i32>} : memref<8x128xbf16, #tpu.memory_space<vmem>>, vector<8x128xbf16>,
    } else {
    }
    %c0_i32_14 = arith.constant 0 : i32
    %28 = arith.cmpi sge, %arg1, %c0_i32_14 : i32
    %29 = arith.extui %28 : i1 to i32
    %c0_i32_15 = arith.constant 0 : i32
    %30 = arith.cmpi ne, %29, %c0_i32_15 : i32
    scf.if %30 {
      %c32_i32 = arith.constant 32 : i32
      %31 = arith.muli %arg1, %c32_i32 : i32
      %32 = tpu.iota {dimensions = array<i32: 0>} : vector<32x128xi32>
      %33 = vector.broadcast %31 : i32 to vector<32x128xi32>
      %34 = arith.addi %33, %32 : vector<32x128xi32>
      %c0_16 = arith.constant 0 : index
      %c0_17 = arith.constant 0 : index
      %35 = vector.load %arg5[%c0_16, %c0_17] : memref<1x128xi32, #tpu.memory_space<vmem>>, vector<1x128xi32>
      %36 = vector.shape_cast %35 : vector<1x128xi32> to vector<128xi32>
      %37 = vector.shape_cast %36 : vector<128xi32> to vector<1x128xi32>
      %38 = vector.broadcast %37 : vector<1x128xi32> to vector<32x128xi32>
      %39 = arith.cmpi slt, %34, %38 : vector<32x128xi32>
      %40 = vector.shape_cast %39 : vector<32x128xi1> to vector<1x32x128xi1>
      %cst_18 = arith.constant 0xFF800000 : f32
      %41 = vector.shape_cast %40 : vector<1x32x128xi1> to vector<1x32x128xi1>
      %42 = vector.broadcast %41 : vector<1x32x128xi1> to vector<8x32x128xi1>
      %43 = vector.broadcast %cst_18 : f32 to vector<8x32x128xf32>
      %44 = arith.select %42, %21, %43 : vector<8x32x128xi1>, vector<8x32x128xf32>
      %cst_19 = arith.constant dense<0xFF800000> : vector<8x128xf32>
      %45 = vector.multi_reduction <maximumf>, %44, %cst_19 [1] : vector<8x32x128xf32> to vector<8x128xf32>
      %c0_20 = arith.constant 0 : index
      %c0_21 = arith.constant 0 : index
      %46 = vector.load %arg6[%c0_20, %c0_21] : memref<8x128xbf16, #tpu.memory_space<vmem>>, vector<8x128xbf16>
      %47 = arith.truncf %45 : vector<8x128xf32> to vector<8x128xbf16>
      %48 = arith.maximumf %46, %47 : vector<8x128xbf16>
      %c0_22 = arith.constant 0 : index
      %c0_23 = arith.constant 0 : index
      %49 = vector.load %arg6[%c0_22, %c0_23] : memref<8x128xbf16, #tpu.memory_space<vmem>>, vector<8x128xbf16>
      tpu.vector_store %arg6[%c0_22, %c0_23], %48 {strides = array<i32>} : memref<8x128xbf16, #tpu.memory_space<vmem>>, vector<8x128xbf16>,
    } else {
    }
    return
  }
  func.func @transform_0(%arg0: i32, %arg1: i32) -> (i32, i32, i32) {
    %c0_i32 = arith.constant 0 : i32
    %c0_i32_0 = arith.constant 0 : i32
    %c0_i32_1 = arith.constant 0 : i32
    return %c0_i32, %arg1, %c0_i32_0 : i32, i32, i32
  }
  func.func @transform_1(%arg0: i32, %arg1: i32) -> (i32, i32) {
    %c0_i32 = arith.constant 0 : i32
    %c0_i32_0 = arith.constant 0 : i32
    return %c0_i32, %arg0 : i32, i32
  }
  func.func @transform_2(%arg0: i32, %arg1: i32) -> (i32, i32) {
    %c0_i32 = arith.constant 0 : i32
    %c0_i32_0 = arith.constant 0 : i32
    return %c0_i32, %arg0 : i32, i32
  }
  func.func @transform_3(%arg0: i32, %arg1: i32) -> (i32, i32) {
    %c0_i32 = arith.constant 0 : i32
    %c0_i32_0 = arith.constant 0 : i32
    return %c0_i32, %arg0 : i32, i32
  }
  func.func @transform_4(%arg0: i32, %arg1: i32) -> (i32, i32) {
    %c0_i32 = arith.constant 0 : i32
    %c0_i32_0 = arith.constant 0 : i32
    return %c0_i32, %arg0 : i32, i32
  }
}

</mosaic_0001>

<llo_original>
// kernel: tpu_custom_call.1
$region0: #{tpu_custom_call.1}
  #allocation0 [shape = 'u32[]', space=smem, size = 0x4, offset = 0x4, fixed_abs, tag = 'smem constant byte address 0x4 - core index']
  #allocation1 [shape = 'u32[144,128]{1,0:T(1,128)}', space=vmem, size = 0x12000, scoped, tag = 'internal scratch']
  %s0 = inlined_call_operand.hbm [shape: bf16[8,32,128], index: 0, kind: input, shape index: {}]
  %s1 = inlined_call_operand.hbm [shape: bf16[128,128], index: 1, kind: input, shape index: {}]
  %s2 = inlined_call_operand.vmem [shape: f32[1,128], index: 2, kind: input, shape index: {}]
  %s3 = inlined_call_operand.vmem [shape: s32[1,128], index: 3, kind: input, shape index: {}]
  %s4 = inlined_call_operand.hbm [shape: bf16[8,128], index: 4, kind: output, shape index: {}]
  %s5 = sld [smem:[#allocation0]]
  $region46: #{tpu_custom_call.1} parent=0
    _
  %s7 = ssub.s32 1, %s5
  %s8 = scalar_select 0, %s7, %s5
  $region1: #{tpu_custom_call.1} parent=0
    #allocation2 [shape = 'u8[65536]{0}', space=vmem, size = 0x10000, scoped, tag = 'input window, operand 0, single buffered']
    #allocation3 [shape = 's32[1]{0}', space=sflag, size = 0x4, scoped, tag = 'scoped memory for tpu_custom_call.1']
    #allocation4 [shape = 's32[1]{0}', space=sflag, size = 0x4, scoped, tag = 'scoped memory for tpu_custom_call.1']
    #allocation5 [shape = 'u8[32768]{0}', space=vmem, size = 0x8000, scoped, tag = 'input window, operand 1, single buffered']
    #allocation6 [shape = 's32[1]{0}', space=sflag, size = 0x4, scoped, tag = 'scoped memory for tpu_custom_call.1']
    #allocation7 [shape = 'u8[2048]{0}', space=vmem, size = 0x800, scoped, tag = 'output window, operand 0, single buffered']
    %9 = vsyncpa [#allocation3], 0
    %10 = vsyncpa [#allocation6], 0
    %11 = vsyncpa [#allocation4], 0
    // Predicated region
    $region2: #{tpu_custom_call.1} parent=1 // pred_check
      _
    $region3: #{tpu_custom_call.1} parent=1 // pred_check_branch
      %13 = sbr.rel (0) target = $region5
    $region4: #{tpu_custom_call.1} parent=1 // pred_region
      %s15 = ssub.s32 2048, 2048
      %16 = vsyncadd [#allocation3], %s15
      %s17 = sshll.u32 [#allocation2], 4
      %s18 = int_to_ptr.vmem [resolvable:$true] %s17
      %23 = dma.hbm_to_vmem [thread:$0]  %s0, 2048, %s18, [#allocation3], 64, 64, 4
    $region5: #{tpu_custom_call.1} parent=1 // pred_fallthru
      _
    // Predicated region
    $region6: #{tpu_custom_call.1} parent=1 // pred_check
      _
    $region7: #{tpu_custom_call.1} parent=1 // pred_check_branch
      %25 = sbr.rel (0) target = $region9
    $region8: #{tpu_custom_call.1} parent=1 // pred_region
      %s27 = ssub.s32 1024, 1024
      %28 = vsyncadd [#allocation6], %s27
      %s29 = sshll.u32 [#allocation5], 4
      %s30 = int_to_ptr.vmem [resolvable:$true] %s29
      %35 = dma.hbm_to_vmem [thread:$0]  %s1, 1024, %s30, [#allocation6], 64, 64, 4
    $region9: #{tpu_custom_call.1} parent=1 // pred_fallthru
      _
    // Predicated region
    $region10: #{tpu_custom_call.1} parent=1 // pred_check
      _
    $region11: #{tpu_custom_call.1} parent=1 // pred_check_branch
      %37 = sbr.rel (0) target = $region13
    $region12: #{tpu_custom_call.1} parent=1 // pred_region
      _
    $region13: #{tpu_custom_call.1} parent=1 // pred_fallthru
      _
    // Predicated region
    $region14: #{tpu_custom_call.1} parent=1 // pred_check
      _
    $region15: #{tpu_custom_call.1} parent=1 // pred_check_branch
      %39 = sbr.rel (0) target = $region17
    $region16: #{tpu_custom_call.1} parent=1 // pred_region
      _
    $region17: #{tpu_custom_call.1} parent=1 // pred_fallthru
      _
    // Predicated region
    $region18: #{tpu_custom_call.1} parent=1 // pred_check
      _
    $region19: #{tpu_custom_call.1} parent=1 // pred_check_branch
      %41 = sbr.rel (0) target = $region21
    $region20: #{tpu_custom_call.1} parent=1 // pred_region
      %42 = dma.done [#allocation3], 2048
    $region21: #{tpu_custom_call.1} parent=1 // pred_fallthru
      _
    // Predicated region
    $region22: #{tpu_custom_call.1} parent=1 // pred_check
      _
    $region23: #{tpu_custom_call.1} parent=1 // pred_check_branch
      %44 = sbr.rel (0) target = $region25
    $region24: #{tpu_custom_call.1} parent=1 // pred_region
      %45 = dma.done [#allocation6], 1024
    $region25: #{tpu_custom_call.1} parent=1 // pred_fallthru
      _
    %v48 = vld [vmem:[#allocation2] sm:$0xf]
    %v49 = vld [vmem:[#allocation2 + $0x4] sm:$0xf]
    %v50 = vld [vmem:[#allocation2 + $0x8] sm:$0xf]
    %v51 = vld [vmem:[#allocation2 + $0xc] sm:$0xf]
    %v52 = vld [vmem:[#allocation2 + $0x10] sm:$0xf]
    %v53 = vld [vmem:[#allocation2 + $0x14] sm:$0xf]
    %v54 = vld [vmem:[#allocation2 + $0x18] sm:$0xf]
    %v55 = vld [vmem:[#allocation2 + $0x1c] sm:$0xf]
    %v56 = vld [vmem:[#allocation2 + $0x20] sm:$0xf]
    %v57 = vld [vmem:[#allocation2 + $0x24] sm:$0xf]
    %v58 = vld [vmem:[#allocation2 + $0x28] sm:$0xf]
    %v59 = vld [vmem:[#allocation2 + $0x2c] sm:$0xf]
    %v60 = vld [vmem:[#allocation2 + $0x30] sm:$0xf]
    %v61 = vld [vmem:[#allocation2 + $0x34] sm:$0xf]
    %v62 = vld [vmem:[#allocation2 + $0x38] sm:$0xf]
    %v63 = vld [vmem:[#allocation2 + $0x3c] sm:$0xf]
    %v64 = vld [vmem:[#allocation2 + $0x40] sm:$0xf]
    %v65 = vld [vmem:[#allocation2 + $0x44] sm:$0xf]
    %v66 = vld [vmem:[#allocation2 + $0x48] sm:$0xf]
    %v67 = vld [vmem:[#allocation2 + $0x4c] sm:$0xf]
    %v68 = vld [vmem:[#allocation2 + $0x50] sm:$0xf]
    %v69 = vld [vmem:[#allocation2 + $0x54] sm:$0xf]
    %v70 = vld [vmem:[#allocation2 + $0x58] sm:$0xf]
    %v71 = vld [vmem:[#allocation2 + $0x5c] sm:$0xf]
    %v72 = vld [vmem:[#allocation2 + $0x60] sm:$0xf]
    %v73 = vld [vmem:[#allocation2 + $0x64] sm:$0xf]
    %v74 = vld [vmem:[#allocation2 + $0x68] sm:$0xf]
    %v75 = vld [vmem:[#allocation2 + $0x6c] sm:$0xf]
    %v76 = vld [vmem:[#allocation2 + $0x70] sm:$0xf]
    %v77 = vld [vmem:[#allocation2 + $0x74] sm:$0xf]
    %v78 = vld [vmem:[#allocation2 + $0x78] sm:$0xf]
    %v79 = vld [vmem:[#allocation2 + $0x7c] sm:$0xf]
    %v80 = vld [vmem:[#allocation5] sm:$0xf]
    %v81 = vld [vmem:[#allocation5 + $0x4] sm:$0xf]
    %v82 = vld [vmem:[#allocation5 + $0x8] sm:$0xf]
    %v83 = vld [vmem:[#allocation5 + $0xc] sm:$0xf]
    %v84 = vld [vmem:[#allocation5 + $0x10] sm:$0xf]
    %v85 = vld [vmem:[#allocation5 + $0x14] sm:$0xf]
    %v86 = vld [vmem:[#allocation5 + $0x18] sm:$0xf]
    %v87 = vld [vmem:[#allocation5 + $0x1c] sm:$0xf]
    %v88 = vld [vmem:[#allocation5 + $0x20] sm:$0xf]
    %v89 = vld [vmem:[#allocation5 + $0x24] sm:$0xf]
    %v90 = vld [vmem:[#allocation5 + $0x28] sm:$0xf]
    %v91 = vld [vmem:[#allocation5 + $0x2c] sm:$0xf]
    %v92 = vld [vmem:[#allocation5 + $0x30] sm:$0xf]
    %v93 = vld [vmem:[#allocation5 + $0x34] sm:$0xf]
    %v94 = vld [vmem:[#allocation5 + $0x38] sm:$0xf]
    %v95 = vld [vmem:[#allocation5 + $0x3c] sm:$0xf]
    %v128 = vunpack.c.l.b16 %v48
    %v129 = vunpack.c.l.b16 %v49
    %v130 = vunpack.c.l.b16 %v50
    %v131 = vunpack.c.l.b16 %v51
    %v132 = vunpack.c.l.b16 %v52
    %v133 = vunpack.c.l.b16 %v53
    %v134 = vunpack.c.l.b16 %v54
    %v135 = vunpack.c.l.b16 %v55
    %v136 = vunpack.c.l.b16 %v56
    %v137 = vunpack.c.l.b16 %v57
    %v138 = vunpack.c.l.b16 %v58
    %v139 = vunpack.c.l.b16 %v59
    %v140 = vunpack.c.l.b16 %v60
    %v141 = vunpack.c.l.b16 %v61
    %v142 = vunpack.c.l.b16 %v62
    %v143 = vunpack.c.l.b16 %v63
    %v144 = vunpack.c.l.b16 %v64
    %v145 = vunpack.c.l.b16 %v65
    %v146 = vunpack.c.l.b16 %v66
    %v147 = vunpack.c.l.b16 %v67
    %v148 = vunpack.c.l.b16 %v68
    %v149 = vunpack.c.l.b16 %v69
    %v150 = vunpack.c.l.b16 %v70
    %v151 = vunpack.c.l.b16 %v71
    %v152 = vunpack.c.l.b16 %v72
    %v153 = vunpack.c.l.b16 %v73
    %v154 = vunpack.c.l.b16 %v74
    %v155 = vunpack.c.l.b16 %v75
    %v156 = vunpack.c.l.b16 %v76
    %v157 = vunpack.c.l.b16 %v77
    %v158 = vunpack.c.l.b16 %v78
    %v159 = vunpack.c.l.b16 %v79
    %v160 = vpack.c.b16 %v129, %v128
    %v161 = vpack.c.b16 %v131, %v130
    %v162 = vpack.c.b16 %v133, %v132
    %v163 = vpack.c.b16 %v135, %v134
    %v164 = vpack.c.b16 %v137, %v136
    %v165 = vpack.c.b16 %v139, %v138
    %v166 = vpack.c.b16 %v141, %v140
    %v167 = vpack.c.b16 %v143, %v142
    %v168 = vpack.c.b16 %v145, %v144
    %v169 = vpack.c.b16 %v147, %v146
    %v170 = vpack.c.b16 %v149, %v148
    %v171 = vpack.c.b16 %v151, %v150
    %v172 = vpack.c.b16 %v153, %v152
    %v173 = vpack.c.b16 %v155, %v154
    %v174 = vpack.c.b16 %v157, %v156
    %v175 = vpack.c.b16 %v159, %v158
    %v208 = vunpack.c.l.b16 %v80
    %v209 = vunpack.c.l.b16 %v81
    %v210 = vunpack.c.l.b16 %v82
    %v211 = vunpack.c.l.b16 %v83
    %v212 = vunpack.c.l.b16 %v84
    %v213 = vunpack.c.l.b16 %v85
    %v214 = vunpack.c.l.b16 %v86
    %v215 = vunpack.c.l.b16 %v87
    %v216 = vunpack.c.l.b16 %v88
    %v217 = vunpack.c.l.b16 %v89
    %v218 = vunpack.c.l.b16 %v90
    %v219 = vunpack.c.l.b16 %v91
    %v220 = vunpack.c.l.b16 %v92
    %v221 = vunpack.c.l.b16 %v93
    %v222 = vunpack.c.l.b16 %v94
    %v223 = vunpack.c.l.b16 %v95
    %v224 = vpack.c.b16 %v209, %v208
    %v225 = vpack.c.b16 %v211, %v210
    %v226 = vpack.c.b16 %v213, %v212
    %v227 = vpack.c.b16 %v215, %v214
    %v228 = vpack.c.b16 %v217, %v216
    %v229 = vpack.c.b16 %v219, %v218
    %v230 = vpack.c.b16 %v221, %v220
    %v231 = vpack.c.b16 %v223, %v222
    %240 = vmatprep.subr.bf16.mxu0 0
    %241 = vmatpush1.bf16.msra.mxu0 %v231
    %242 = vmatprep.subr.bf16.mxu0 0
    %243 = vmatpush1.bf16.msra.mxu0 %v230
    %244 = vmatprep.subr.bf16.mxu0 0
    %245 = vmatpush1.bf16.msra.mxu0 %v229
    %246 = vmatprep.subr.bf16.mxu0 0
    %247 = vmatpush1.bf16.msra.mxu0 %v228
    %248 = vmatprep.subr.bf16.mxu0 0
    %249 = vmatpush1.bf16.msra.mxu0 %v227
    %250 = vmatprep.subr.bf16.mxu0 0
    %251 = vmatpush1.bf16.msra.mxu0 %v226
    %252 = vmatprep.subr.bf16.mxu0 0
    %253 = vmatpush1.bf16.msra.mxu0 %v225
    %254 = vmatprep.subr.bf16.mxu0 0
    %255 = vmatpush1.bf16.msra.mxu0 %v224
    %256 = vmatprep.subr.bf16.mxu0 0
    %257 = vmatpush2.bf16.msra.mxu0 0
    %258 = vmatprep.subr.bf16.mxu0 0
    %259 = vmatpush2.bf16.msra.mxu0 0
    %260 = vmatprep.subr.bf16.mxu0 0
    %261 = vmatpush2.bf16.msra.mxu0 0
    %262 = vmatprep.subr.bf16.mxu0 0
    %263 = vmatpush2.bf16.msra.mxu0 0
    %264 = vmatprep.subr.bf16.mxu0 0
    %265 = vmatpush2.bf16.msra.mxu0 0
    %266 = vmatprep.subr.bf16.mxu0 0
    %267 = vmatpush2.bf16.msra.mxu0 0
    %268 = vmatprep.subr.bf16.mxu0 0
    %269 = vmatpush2.bf16.msra.mxu0 0
    %270 = vmatprep.subr.bf16.mxu0 0
    %271 = vmatpush2.bf16.msra.mxu0 0
    %272 = vmatprep.mubr.bf16.mxu0 0
    %273 = vmatmul.mubr.bf16.gmra.mxu0 %v160
    %v274 = vpop.f32.mrf.mxu0
    %v275 = vadd.f32 0.0, %v274
    %v276 = vpop.f32.mrf.mxu0
    %v277 = vpop.f32.mrf.mxu0
    %v278 = vadd.f32 0.0, %v277
    %v279 = vpop.f32.mrf.mxu0
    %280 = vmatprep.mubr.bf16.mxu0 0
    %281 = vmatmul.mubr.bf16.gmra.mxu0 %v161
    %v282 = vpop.f32.mrf.mxu0
    %v283 = vadd.f32 0.0, %v282
    %v284 = vpop.f32.mrf.mxu0
    %v285 = vpop.f32.mrf.mxu0
    %v286 = vadd.f32 0.0, %v285
    %v287 = vpop.f32.mrf.mxu0
    %288 = vmatprep.mubr.bf16.mxu0 0
    %289 = vmatmul.mubr.bf16.gmra.mxu0 %v162
    %v290 = vpop.f32.mrf.mxu0
    %v291 = vadd.f32 0.0, %v290
    %v292 = vpop.f32.mrf.mxu0
    %v293 = vpop.f32.mrf.mxu0
    %v294 = vadd.f32 0.0, %v293
    %v295 = vpop.f32.mrf.mxu0
    %296 = vmatprep.mubr.bf16.mxu0 0
    %297 = vmatmul.mubr.bf16.gmra.mxu0 %v163
    %v298 = vpop.f32.mrf.mxu0
    %v299 = vadd.f32 0.0, %v298
    %v300 = vpop.f32.mrf.mxu0
    %v301 = vpop.f32.mrf.mxu0
    %v302 = vadd.f32 0.0, %v301
    %v303 = vpop.f32.mrf.mxu0
    %304 = vmatprep.mubr.bf16.mxu0 0
    %305 = vmatmul.mubr.bf16.gmra.mxu0 %v164
    %v306 = vpop.f32.mrf.mxu0
    %v307 = vadd.f32 0.0, %v306
    %v308 = vpop.f32.mrf.mxu0
    %v309 = vpop.f32.mrf.mxu0
    %v310 = vadd.f32 0.0, %v309
    %v311 = vpop.f32.mrf.mxu0
    %312 = vmatprep.mubr.bf16.mxu0 0
    %313 = vmatmul.mubr.bf16.gmra.mxu0 %v165
    %v314 = vpop.f32.mrf.mxu0
    %v315 = vadd.f32 0.0, %v314
    %v316 = vpop.f32.mrf.mxu0
    %v317 = vpop.f32.mrf.mxu0
    %v318 = vadd.f32 0.0, %v317
    %v319 = vpop.f32.mrf.mxu0
    %320 = vmatprep.mubr.bf16.mxu0 0
    %321 = vmatmul.mubr.bf16.gmra.mxu0 %v166
    %v322 = vpop.f32.mrf.mxu0
    %v323 = vadd.f32 0.0, %v322
    %v324 = vpop.f32.mrf.mxu0
    %v325 = vpop.f32.mrf.mxu0
    %v326 = vadd.f32 0.0, %v325
    %v327 = vpop.f32.mrf.mxu0
    %328 = vmatprep.mubr.bf16.mxu0 0
    %329 = vmatmul.mubr.bf16.gmra.mxu0 %v167
    %v330 = vpop.f32.mrf.mxu0
    %v331 = vadd.f32 0.0, %v330
    %v332 = vpop.f32.mrf.mxu0
    %v333 = vpop.f32.mrf.mxu0
    %v334 = vadd.f32 0.0, %v333
    %v335 = vpop.f32.mrf.mxu0
    %336 = vmatprep.mubr.bf16.mxu0 0
    %337 = vmatmul.mubr.bf16.gmra.mxu0 %v168
    %v338 = vpop.f32.mrf.mxu0
    %v339 = vadd.f32 0.0, %v338
    %v340 = vpop.f32.mrf.mxu0
    %v341 = vpop.f32.mrf.mxu0
    %v342 = vadd.f32 0.0, %v341
    %v343 = vpop.f32.mrf.mxu0
    %344 = vmatprep.mubr.bf16.mxu0 0
    %345 = vmatmul.mubr.bf16.gmra.mxu0 %v169
    %v346 = vpop.f32.mrf.mxu0
    %v347 = vadd.f32 0.0, %v346
    %v348 = vpop.f32.mrf.mxu0
    %v349 = vpop.f32.mrf.mxu0
    %v350 = vadd.f32 0.0, %v349
    %v351 = vpop.f32.mrf.mxu0
    %352 = vmatprep.mubr.bf16.mxu0 0
    %353 = vmatmul.mubr.bf16.gmra.mxu0 %v170
    %v354 = vpop.f32.mrf.mxu0
    %v355 = vadd.f32 0.0, %v354
    %v356 = vpop.f32.mrf.mxu0
    %v357 = vpop.f32.mrf.mxu0
    %v358 = vadd.f32 0.0, %v357
    %v359 = vpop.f32.mrf.mxu0
    %360 = vmatprep.mubr.bf16.mxu0 0
    %361 = vmatmul.mubr.bf16.gmra.mxu0 %v171
    %v362 = vpop.f32.mrf.mxu0
    %v363 = vadd.f32 0.0, %v362
    %v364 = vpop.f32.mrf.mxu0
    %v365 = vpop.f32.mrf.mxu0
    %v366 = vadd.f32 0.0, %v365
    %v367 = vpop.f32.mrf.mxu0
    %368 = vmatprep.mubr.bf16.mxu0 0
    %369 = vmatmul.mubr.bf16.gmra.mxu0 %v172
    %v370 = vpop.f32.mrf.mxu0
    %v371 = vadd.f32 0.0, %v370
    %v372 = vpop.f32.mrf.mxu0
    %v373 = vpop.f32.mrf.mxu0
    %v374 = vadd.f32 0.0, %v373
    %v375 = vpop.f32.mrf.mxu0
    %376 = vmatprep.mubr.bf16.mxu0 0
    %377 = vmatmul.mubr.bf16.gmra.mxu0 %v173
    %v378 = vpop.f32.mrf.mxu0
    %v379 = vadd.f32 0.0, %v378
    %v380 = vpop.f32.mrf.mxu0
    %v381 = vpop.f32.mrf.mxu0
    %v382 = vadd.f32 0.0, %v381
    %v383 = vpop.f32.mrf.mxu0
    %384 = vmatprep.mubr.bf16.mxu0 0
    %385 = vmatmul.mubr.bf16.gmra.mxu0 %v174
    %v386 = vpop.f32.mrf.mxu0
    %v387 = vadd.f32 0.0, %v386
    %v388 = vpop.f32.mrf.mxu0
    %v389 = vpop.f32.mrf.mxu0
    %v390 = vadd.f32 0.0, %v389
    %v391 = vpop.f32.mrf.mxu0
    %392 = vmatprep.mubr.bf16.mxu0 0
    %393 = vmatmul.mubr.bf16.gmra.mxu0 %v175
    %v394 = vpop.f32.mrf.mxu0
    %v395 = vadd.f32 0.0, %v394
    %v396 = vpop.f32.mrf.mxu0
    %v397 = vpop.f32.mrf.mxu0
    %v398 = vadd.f32 0.0, %v397
    %v399 = vpop.f32.mrf.mxu0
    %400 = vdwg.mxu0
    %v401 = vld [vmem:[%s2] sm:$0x1]
    %v403 = vlaneseq
    %v404 = vshrl.u32 %v403, 7
    %v405 = vsub.s32 0, %v404
    %v406 = vrot.slane %v401, %v405
    %v408 = vadd.f32 %v275, %v406
    %v409 = vadd.f32 %v278, %v406
    %v410 = vadd.f32 %v283, %v406
    %v411 = vadd.f32 %v286, %v406
    %v412 = vadd.f32 %v291, %v406
    %v413 = vadd.f32 %v294, %v406
    %v414 = vadd.f32 %v299, %v406
    %v415 = vadd.f32 %v302, %v406
    %v416 = vadd.f32 %v307, %v406
    %v417 = vadd.f32 %v310, %v406
    %v418 = vadd.f32 %v315, %v406
    %v419 = vadd.f32 %v318, %v406
    %v420 = vadd.f32 %v323, %v406
    %v421 = vadd.f32 %v326, %v406
    %v422 = vadd.f32 %v331, %v406
    %v423 = vadd.f32 %v334, %v406
    %v424 = vadd.f32 %v339, %v406
    %v425 = vadd.f32 %v342, %v406
    %v426 = vadd.f32 %v347, %v406
    %v427 = vadd.f32 %v350, %v406
    %v428 = vadd.f32 %v355, %v406
    %v429 = vadd.f32 %v358, %v406
    %v430 = vadd.f32 %v363, %v406
    %v431 = vadd.f32 %v366, %v406
    %v432 = vadd.f32 %v371, %v406
    %v433 = vadd.f32 %v374, %v406
    %v434 = vadd.f32 %v379, %v406
    %v435 = vadd.f32 %v382, %v406
    %v436 = vadd.f32 %v387, %v406
    %v437 = vadd.f32 %v390, %v406
    %v438 = vadd.f32 %v395, %v406
    %v439 = vadd.f32 %v398, %v406
    %vm440 = vcmp.gt.f32.partialorder %v408, 0.0
    %vm441 = vcmp.gt.f32.partialorder %v409, 0.0
    %vm442 = vcmp.gt.f32.partialorder %v410, 0.0
    %vm443 = vcmp.gt.f32.partialorder %v411, 0.0
    %vm444 = vcmp.gt.f32.partialorder %v412, 0.0
    %vm445 = vcmp.gt.f32.partialorder %v413, 0.0
    %vm446 = vcmp.gt.f32.partialorder %v414, 0.0
    %vm447 = vcmp.gt.f32.partialorder %v415, 0.0
    %vm448 = vcmp.gt.f32.partialorder %v416, 0.0
    %vm449 = vcmp.gt.f32.partialorder %v417, 0.0
    %vm450 = vcmp.gt.f32.partialorder %v418, 0.0
    %vm451 = vcmp.gt.f32.partialorder %v419, 0.0
    %vm452 = vcmp.gt.f32.partialorder %v420, 0.0
    %vm453 = vcmp.gt.f32.partialorder %v421, 0.0
    %vm454 = vcmp.gt.f32.partialorder %v422, 0.0
    %vm455 = vcmp.gt.f32.partialorder %v423, 0.0
    %vm456 = vcmp.gt.f32.partialorder %v424, 0.0
    %vm457 = vcmp.gt.f32.partialorder %v425, 0.0
    %vm458 = vcmp.gt.f32.partialorder %v426, 0.0
    %vm459 = vcmp.gt.f32.partialorder %v427, 0.0
    %vm460 = vcmp.gt.f32.partialorder %v428, 0.0
    %vm461 = vcmp.gt.f32.partialorder %v429, 0.0
    %vm462 = vcmp.gt.f32.partialorder %v430, 0.0
    %vm463 = vcmp.gt.f32.partialorder %v431, 0.0
    %vm464 = vcmp.gt.f32.partialorder %v432, 0.0
    %vm465 = vcmp.gt.f32.partialorder %v433, 0.0
    %vm466 = vcmp.gt.f32.partialorder %v434, 0.0
    %vm467 = vcmp.gt.f32.partialorder %v435, 0.0
    %vm468 = vcmp.gt.f32.partialorder %v436, 0.0
    %vm469 = vcmp.gt.f32.partialorder %v437, 0.0
    %vm470 = vcmp.gt.f32.partialorder %v438, 0.0
    %vm471 = vcmp.gt.f32.partialorder %v439, 0.0
    %v472 = vmin.f32 %v408, 0.0
    %v473 = vmin.f32 %v409, 0.0
    %v474 = vmin.f32 %v410, 0.0
    %v475 = vmin.f32 %v411, 0.0
    %v476 = vmin.f32 %v412, 0.0
    %v477 = vmin.f32 %v413, 0.0
    %v478 = vmin.f32 %v414, 0.0
    %v479 = vmin.f32 %v415, 0.0
    %v480 = vmin.f32 %v416, 0.0
    %v481 = vmin.f32 %v417, 0.0
    %v482 = vmin.f32 %v418, 0.0
    %v483 = vmin.f32 %v419, 0.0
    %v484 = vmin.f32 %v420, 0.0
    %v485 = vmin.f32 %v421, 0.0
    %v486 = vmin.f32 %v422, 0.0
    %v487 = vmin.f32 %v423, 0.0
    %v488 = vmin.f32 %v424, 0.0
    %v489 = vmin.f32 %v425, 0.0
    %v490 = vmin.f32 %v426, 0.0
    %v491 = vmin.f32 %v427, 0.0
    %v492 = vmin.f32 %v428, 0.0
    %v493 = vmin.f32 %v429, 0.0
    %v494 = vmin.f32 %v430, 0.0
    %v495 = vmin.f32 %v431, 0.0
    %v496 = vmin.f32 %v432, 0.0
    %v497 = vmin.f32 %v433, 0.0
    %v498 = vmin.f32 %v434, 0.0
    %v499 = vmin.f32 %v435, 0.0
    %v500 = vmin.f32 %v436, 0.0
    %v501 = vmin.f32 %v437, 0.0
    %v502 = vmin.f32 %v438, 0.0
    %v503 = vmin.f32 %v439, 0.0
    %v504 = vmul.f32 %v472, 1.442695
    %v505 = vpow.pop %v504
    %v506 = vmul.f32 %v473, 1.442695
    %v507 = vpow.pop %v506
    %v508 = vmul.f32 %v474, 1.442695
    %v509 = vpow.pop %v508
    %v510 = vmul.f32 %v475, 1.442695
    %v511 = vpow.pop %v510
    %v512 = vmul.f32 %v476, 1.442695
    %v513 = vpow.pop %v512
    %v514 = vmul.f32 %v477, 1.442695
    %v515 = vpow.pop %v514
    %v516 = vmul.f32 %v478, 1.442695
    %v517 = vpow.pop %v516
    %v518 = vmul.f32 %v479, 1.442695
    %v519 = vpow.pop %v518
    %v520 = vmul.f32 %v480, 1.442695
    %v521 = vpow.pop %v520
    %v522 = vmul.f32 %v481, 1.442695
    %v523 = vpow.pop %v522
    %v524 = vmul.f32 %v482, 1.442695
    %v525 = vpow.pop %v524
    %v526 = vmul.f32 %v483, 1.442695
    %v527 = vpow.pop %v526
    %v528 = vmul.f32 %v484, 1.442695
    %v529 = vpow.pop %v528
    %v530 = vmul.f32 %v485, 1.442695
    %v531 = vpow.pop %v530
    %v532 = vmul.f32 %v486, 1.442695
    %v533 = vpow.pop %v532
    %v534 = vmul.f32 %v487, 1.442695
    %v535 = vpow.pop %v534
    %v536 = vmul.f32 %v488, 1.442695
    %v537 = vpow.pop %v536
    %v538 = vmul.f32 %v489, 1.442695
    %v539 = vpow.pop %v538
    %v540 = vmul.f32 %v490, 1.442695
    %v541 = vpow.pop %v540
    %v542 = vmul.f32 %v491, 1.442695
    %v543 = vpow.pop %v542
    %v544 = vmul.f32 %v492, 1.442695
    %v545 = vpow.pop %v544
    %v546 = vmul.f32 %v493, 1.442695
    %v547 = vpow.pop %v546
    %v548 = vmul.f32 %v494, 1.442695
    %v549 = vpow.pop %v548
    %v550 = vmul.f32 %v495, 1.442695
    %v551 = vpow.pop %v550
    %v552 = vmul.f32 %v496, 1.442695
    %v553 = vpow.pop %v552
    %v554 = vmul.f32 %v497, 1.442695
    %v555 = vpow.pop %v554
    %v556 = vmul.f32 %v498, 1.442695
    %v557 = vpow.pop %v556
    %v558 = vmul.f32 %v499, 1.442695
    %v559 = vpow.pop %v558
    %v560 = vmul.f32 %v500, 1.442695
    %v561 = vpow.pop %v560
    %v562 = vmul.f32 %v501, 1.442695
    %v563 = vpow.pop %v562
    %v564 = vmul.f32 %v502, 1.442695
    %v565 = vpow.pop %v564
    %v566 = vmul.f32 %v503, 1.442695
    %v567 = vpow.pop %v566
    %v568 = vsub.f32 %v505, 1.0
    %v569 = vsub.f32 %v507, 1.0
    %v570 = vsub.f32 %v509, 1.0
    %v571 = vsub.f32 %v511, 1.0
    %v572 = vsub.f32 %v513, 1.0
    %v573 = vsub.f32 %v515, 1.0
    %v574 = vsub.f32 %v517, 1.0
    %v575 = vsub.f32 %v519, 1.0
    %v576 = vsub.f32 %v521, 1.0
    %v577 = vsub.f32 %v523, 1.0
    %v578 = vsub.f32 %v525, 1.0
    %v579 = vsub.f32 %v527, 1.0
    %v580 = vsub.f32 %v529, 1.0
    %v581 = vsub.f32 %v531, 1.0
    %v582 = vsub.f32 %v533, 1.0
    %v583 = vsub.f32 %v535, 1.0
    %v584 = vsub.f32 %v537, 1.0
    %v585 = vsub.f32 %v539, 1.0
    %v586 = vsub.f32 %v541, 1.0
    %v587 = vsub.f32 %v543, 1.0
    %v588 = vsub.f32 %v545, 1.0
    %v589 = vsub.f32 %v547, 1.0
    %v590 = vsub.f32 %v549, 1.0
    %v591 = vsub.f32 %v551, 1.0
    %v592 = vsub.f32 %v553, 1.0
    %v593 = vsub.f32 %v555, 1.0
    %v594 = vsub.f32 %v557, 1.0
    %v595 = vsub.f32 %v559, 1.0
    %v596 = vsub.f32 %v561, 1.0
    %v597 = vsub.f32 %v563, 1.0
    %v598 = vsub.f32 %v565, 1.0
    %v599 = vsub.f32 %v567, 1.0
    %v600 = vmul.f32 %v568, 1.6732632
    %v601 = vmul.f32 %v569, 1.6732632
    %v602 = vmul.f32 %v570, 1.6732632
    %v603 = vmul.f32 %v571, 1.6732632
    %v604 = vmul.f32 %v572, 1.6732632
    %v605 = vmul.f32 %v573, 1.6732632
    %v606 = vmul.f32 %v574, 1.6732632
    %v607 = vmul.f32 %v575, 1.6732632
    %v608 = vmul.f32 %v576, 1.6732632
    %v609 = vmul.f32 %v577, 1.6732632
    %v610 = vmul.f32 %v578, 1.6732632
    %v611 = vmul.f32 %v579, 1.6732632
    %v612 = vmul.f32 %v580, 1.6732632
    %v613 = vmul.f32 %v581, 1.6732632
    %v614 = vmul.f32 %v582, 1.6732632
    %v615 = vmul.f32 %v583, 1.6732632
    %v616 = vmul.f32 %v584, 1.6732632
    %v617 = vmul.f32 %v585, 1.6732632
    %v618 = vmul.f32 %v586, 1.6732632
    %v619 = vmul.f32 %v587, 1.6732632
    %v620 = vmul.f32 %v588, 1.6732632
    %v621 = vmul.f32 %v589, 1.6732632
    %v622 = vmul.f32 %v590, 1.6732632
    %v623 = vmul.f32 %v591, 1.6732632
    %v624 = vmul.f32 %v592, 1.6732632
    %v625 = vmul.f32 %v593, 1.6732632
    %v626 = vmul.f32 %v594, 1.6732632
    %v627 = vmul.f32 %v595, 1.6732632
    %v628 = vmul.f32 %v596, 1.6732632
    %v629 = vmul.f32 %v597, 1.6732632
    %v630 = vmul.f32 %v598, 1.6732632
    %v631 = vmul.f32 %v599, 1.6732632
    %v632 = vsel %vm440, %v408, %v600
    %v633 = vsel %vm441, %v409, %v601
    %v634 = vsel %vm442, %v410, %v602
    %v635 = vsel %vm443, %v411, %v603
    %v636 = vsel %vm444, %v412, %v604
    %v637 = vsel %vm445, %v413, %v605
    %v638 = vsel %vm446, %v414, %v606
    %v639 = vsel %vm447, %v415, %v607
    %v640 = vsel %vm448, %v416, %v608
    %v641 = vsel %vm449, %v417, %v609
    %v642 = vsel %vm450, %v418, %v610
    %v643 = vsel %vm451, %v419, %v611
    %v644 = vsel %vm452, %v420, %v612
    %v645 = vsel %vm453, %v421, %v613
    %v646 = vsel %vm454, %v422, %v614
    %v647 = vsel %vm455, %v423, %v615
    %v648 = vsel %vm456, %v424, %v616
    %v649 = vsel %vm457, %v425, %v617
    %v650 = vsel %vm458, %v426, %v618
    %v651 = vsel %vm459, %v427, %v619
    %v652 = vsel %vm460, %v428, %v620
    %v653 = vsel %vm461, %v429, %v621
    %v654 = vsel %vm462, %v430, %v622
    %v655 = vsel %vm463, %v431, %v623
    %v656 = vsel %vm464, %v432, %v624
    %v657 = vsel %vm465, %v433, %v625
    %v658 = vsel %vm466, %v434, %v626
    %v659 = vsel %vm467, %v435, %v627
    %v660 = vsel %vm468, %v436, %v628
    %v661 = vsel %vm469, %v437, %v629
    %v662 = vsel %vm470, %v438, %v630
    %v663 = vsel %vm471, %v439, %v631
    %v664 = vmul.f32 %v632, 1.050701
    %v665 = vmul.f32 %v633, 1.050701
    %v666 = vmul.f32 %v634, 1.050701
    %v667 = vmul.f32 %v635, 1.050701
    %v668 = vmul.f32 %v636, 1.050701
    %v669 = vmul.f32 %v637, 1.050701
    %v670 = vmul.f32 %v638, 1.050701
    %v671 = vmul.f32 %v639, 1.050701
    %v672 = vmul.f32 %v640, 1.050701
    %v673 = vmul.f32 %v641, 1.050701
    %v674 = vmul.f32 %v642, 1.050701
    %v675 = vmul.f32 %v643, 1.050701
    %v676 = vmul.f32 %v644, 1.050701
    %v677 = vmul.f32 %v645, 1.050701
    %v678 = vmul.f32 %v646, 1.050701
    %v679 = vmul.f32 %v647, 1.050701
    %v680 = vmul.f32 %v648, 1.050701
    %v681 = vmul.f32 %v649, 1.050701
    %v682 = vmul.f32 %v650, 1.050701
    %v683 = vmul.f32 %v651, 1.050701
    %v684 = vmul.f32 %v652, 1.050701
    %v685 = vmul.f32 %v653, 1.050701
    %v686 = vmul.f32 %v654, 1.050701
    %v687 = vmul.f32 %v655, 1.050701
    %v688 = vmul.f32 %v656, 1.050701
    %v689 = vmul.f32 %v657, 1.050701
    %v690 = vmul.f32 %v658, 1.050701
    %v691 = vmul.f32 %v659, 1.050701
    %v692 = vmul.f32 %v660, 1.050701
    %v693 = vmul.f32 %v661, 1.050701
    %v694 = vmul.f32 %v662, 1.050701
    %v695 = vmul.f32 %v663, 1.050701
    %p696 = scmp.eq.s32.totalorder 0, 0
    // Predicated region
    $region26: #{tpu_custom_call.1} parent=1 // pred_check
      %p697 = pneg %p696
    $region27: #{tpu_custom_call.1} parent=1 // pred_check_branch
      %699 = sbr.rel (%p697) target = $region29
    $region28: #{tpu_custom_call.1} parent=1 // pred_region
      %700 = vst [vmem:[#allocation7] sm:$0xf] 4286644096
    $region29: #{tpu_custom_call.1} parent=1 // pred_fallthru
      _
    %p701 = scmp.lt.s32.totalorder 0, 0
    // Predicated region
    $region30: #{tpu_custom_call.1} parent=1 // pred_check
      %p702 = pneg %p701
    $region31: #{tpu_custom_call.1} parent=1 // pred_check_branch
      %704 = sbr.rel (%p702) target = $region33
    $region32: #{tpu_custom_call.1} parent=1 // pred_region
      %v705 = vld [vmem:[#allocation7] sm:$0xf]
      %v706 = vmax.f32 %v664, %v665
      %v707 = vmax.f32 %v706, %v666
      %v708 = vmax.f32 %v707, %v667
      %v709 = vrot.slane %v708, 4
      %v710 = vmax.f32 %v708, %v709
      %v711 = vrot.slane %v710, 2
      %v712 = vmax.f32 %v710, %v711
      %v713 = vrot.slane %v712, 1
      %v714 = vmax.f32 %v712, %v713
      %v715 = vmax.f32 %v668, %v669
      %v716 = vmax.f32 %v715, %v670
      %v717 = vmax.f32 %v716, %v671
      %v718 = vrot.slane %v717, 4
      %v719 = vmax.f32 %v717, %v718
      %v720 = vrot.slane %v719, 2
      %v721 = vmax.f32 %v719, %v720
      %v722 = vrot.slane %v721, 1
      %v723 = vmax.f32 %v721, %v722
      %v724 = vmax.f32 %v672, %v673
      %v725 = vmax.f32 %v724, %v674
      %v726 = vmax.f32 %v725, %v675
      %v727 = vrot.slane %v726, 4
      %v728 = vmax.f32 %v726, %v727
      %v729 = vrot.slane %v728, 2
      %v730 = vmax.f32 %v728, %v729
      %v731 = vrot.slane %v730, 1
      %v732 = vmax.f32 %v730, %v731
      %v733 = vmax.f32 %v676, %v677
      %v734 = vmax.f32 %v733, %v678
      %v735 = vmax.f32 %v734, %v679
      %v736 = vrot.slane %v735, 4
      %v737 = vmax.f32 %v735, %v736
      %v738 = vrot.slane %v737, 2
      %v739 = vmax.f32 %v737, %v738
      %v740 = vrot.slane %v739, 1
      %v741 = vmax.f32 %v739, %v740
      %v742 = vmax.f32 %v680, %v681
      %v743 = vmax.f32 %v742, %v682
      %v744 = vmax.f32 %v743, %v683
      %v745 = vrot.slane %v744, 4
      %v746 = vmax.f32 %v744, %v745
      %v747 = vrot.slane %v746, 2
      %v748 = vmax.f32 %v746, %v747
      %v749 = vrot.slane %v748, 1
      %v750 = vmax.f32 %v748, %v749
      %v751 = vmax.f32 %v684, %v685
      %v752 = vmax.f32 %v751, %v686
      %v753 = vmax.f32 %v752, %v687
      %v754 = vrot.slane %v753, 4
      %v755 = vmax.f32 %v753, %v754
      %v756 = vrot.slane %v755, 2
      %v757 = vmax.f32 %v755, %v756
      %v758 = vrot.slane %v757, 1
      %v759 = vmax.f32 %v757, %v758
      %v760 = vmax.f32 %v688, %v689
      %v761 = vmax.f32 %v760, %v690
      %v762 = vmax.f32 %v761, %v691
      %v763 = vrot.slane %v762, 4
      %v764 = vmax.f32 %v762, %v763
      %v765 = vrot.slane %v764, 2
      %v766 = vmax.f32 %v764, %v765
      %v767 = vrot.slane %v766, 1
      %v768 = vmax.f32 %v766, %v767
      %v769 = vmax.f32 %v692, %v693
      %v770 = vmax.f32 %v769, %v694
      %v771 = vmax.f32 %v770, %v695
      %v772 = vrot.slane %v771, 4
      %v773 = vmax.f32 %v771, %v772
      %v774 = vrot.slane %v773, 2
      %v775 = vmax.f32 %v773, %v774
      %v776 = vrot.slane %v775, 1
      %v777 = vmax.f32 %v775, %v776
      %v778 = vpack.c.bf16 %v714, %v714
      %v779 = vpack.c.bf16 %v723, %v723
      %v780 = vpack.c.bf16 %v732, %v732
      %v781 = vpack.c.bf16 %v741, %v741
      %v782 = vpack.c.bf16 %v750, %v750
      %v783 = vpack.c.bf16 %v759, %v759
      %v784 = vpack.c.bf16 %v768, %v768
      %v785 = vpack.c.bf16 %v777, %v777
      %v794 = vunpack.c.l.b16 %v778
      %v795 = vunpack.c.l.b16 %v779
      %v796 = vunpack.c.l.b16 %v780
      %v797 = vunpack.c.l.b16 %v781
      %v798 = vunpack.c.l.b16 %v782
      %v799 = vunpack.c.l.b16 %v783
      %v800 = vunpack.c.l.b16 %v784
      %v801 = vunpack.c.l.b16 %v785
      %v802 = vpack.c.b16 %v794, %v794
      %v803 = vpack.c.b16 %v795, %v795
      %v804 = vpack.c.b16 %v796, %v796
      %v805 = vpack.c.b16 %v797, %v797
      %v806 = vpack.c.b16 %v798, %v798
      %v807 = vpack.c.b16 %v799, %v799
      %v808 = vpack.c.b16 %v800, %v800
      %v809 = vpack.c.b16 %v801, %v801
      %v810 = vunpack.c.l.b16 %v802
      %v811 = vunpack.c.l.b16 %v803
      %v812 = vunpack.c.l.b16 %v804
      %v813 = vunpack.c.l.b16 %v805
      %v814 = vunpack.c.l.b16 %v806
      %v815 = vunpack.c.l.b16 %v807
      %v816 = vunpack.c.l.b16 %v808
      %v817 = vunpack.c.l.b16 %v809
      %vm818 = vcmask 1041409
      %v819 = vsel %vm818, %v811, %v810
      %vm820 = vcmask 1042434
      %v821 = vsel %vm820, %v812, %v819
      %vm822 = vcmask 1043459
      %v823 = vsel %vm822, %v813, %v821
      %vm824 = vcmask 1044484
      %v825 = vsel %vm824, %v814, %v823
      %vm826 = vcmask 1045509
      %v827 = vsel %vm826, %v815, %v825
      %vm828 = vcmask 1046534
      %v829 = vsel %vm828, %v816, %v827
      %vm830 = vcmask 1047559
      %v831 = vsel %vm830, %v817, %v829
      %v832 = vpack.c.b16 %v831, %v831
      %v834 = vmax.bf16 %v705, %v832
      %835 = vst [vmem:[#allocation7] sm:$0xf] %v834
    $region33: #{tpu_custom_call.1} parent=1 // pred_fallthru
      _
    %p836 = scmp.ge.s32.totalorder 0, 0
    // Predicated region
    $region34: #{tpu_custom_call.1} parent=1 // pred_check
      %p837 = pneg %p836
    $region35: #{tpu_custom_call.1} parent=1 // pred_check_branch
      %839 = sbr.rel (%p837) target = $region37
    $region36: #{tpu_custom_call.1} parent=1 // pred_region
      %s840 = smul.u32 0, 32
      %v841 = vlaneseq
      %v842 = vshrl.u32 %v841, 7
      %v843 = vadd.s32 %v842, 8
      %v844 = vadd.s32 %v842, 16
      %v845 = vadd.s32 %v842, 24
      %v846 = vstv %s840
      %v847 = vadd.s32 %v846, %v842
      %v848 = vadd.s32 %v846, %v843
      %v849 = vadd.s32 %v846, %v844
      %v850 = vadd.s32 %v846, %v845
      %v851 = vld [vmem:[%s3] sm:$0x1]
      %v852 = vlaneseq
      %v853 = vshrl.u32 %v852, 7
      %v854 = vsub.s32 0, %v853
      %v855 = vrot.slane %v851, %v854
      %vm856 = vcmp.lt.s32.totalorder %v847, %v855
      %vm857 = vcmp.lt.s32.totalorder %v848, %v855
      %vm858 = vcmp.lt.s32.totalorder %v849, %v855
      %vm859 = vcmp.lt.s32.totalorder %v850, %v855
      %v860 = vsel %vm856, 1, 0
      %v861 = vsel %vm857, 1, 0
      %v862 = vsel %vm858, 1, 0
      %v863 = vsel %vm859, 1, 0
      %vm864 = vcmp.eq.s32.totalorder %v860, 1
      %vm865 = vcmp.eq.s32.totalorder %v861, 1
      %vm866 = vcmp.eq.s32.totalorder %v862, 1
      %vm867 = vcmp.eq.s32.totalorder %v863, 1
      %v868 = vsel %vm864, %v664, -inf
      %v869 = vsel %vm865, %v665, -inf
      %v870 = vsel %vm866, %v666, -inf
      %v871 = vsel %vm867, %v667, -inf
      %v872 = vsel %vm864, %v668, -inf
      %v873 = vsel %vm865, %v669, -inf
      %v874 = vsel %vm866, %v670, -inf
      %v875 = vsel %vm867, %v671, -inf
      %v876 = vsel %vm864, %v672, -inf
      %v877 = vsel %vm865, %v673, -inf
      %v878 = vsel %vm866, %v674, -inf
      %v879 = vsel %vm867, %v675, -inf
      %v880 = vsel %vm864, %v676, -inf
      %v881 = vsel %vm865, %v677, -inf
      %v882 = vsel %vm866, %v678, -inf
      %v883 = vsel %vm867, %v679, -inf
      %v884 = vsel %vm864, %v680, -inf
      %v885 = vsel %vm865, %v681, -inf
      %v886 = vsel %vm866, %v682, -inf
      %v887 = vsel %vm867, %v683, -inf
      %v888 = vsel %vm864, %v684, -inf
      %v889 = vsel %vm865, %v685, -inf
      %v890 = vsel %vm866, %v686, -inf
      %v891 = vsel %vm867, %v687, -inf
      %v892 = vsel %vm864, %v688, -inf
      %v893 = vsel %vm865, %v689, -inf
      %v894 = vsel %vm866, %v690, -inf
      %v895 = vsel %vm867, %v691, -inf
      %v896 = vsel %vm864, %v692, -inf
      %v897 = vsel %vm865, %v693, -inf
      %v898 = vsel %vm866, %v694, -inf
      %v899 = vsel %vm867, %v695, -inf
      %v900 = vmax.f32 %v868, %v869
      %v901 = vmax.f32 %v900, %v870
      %v902 = vmax.f32 %v901, %v871
      %v903 = vrot.slane %v902, 4
      %v904 = vmax.f32 %v902, %v903
      %v905 = vrot.slane %v904, 2
      %v906 = vmax.f32 %v904, %v905
      %v907 = vrot.slane %v906, 1
      %v908 = vmax.f32 %v906, %v907
      %v909 = vmax.f32 %v872, %v873
      %v910 = vmax.f32 %v909, %v874
      %v911 = vmax.f32 %v910, %v875
      %v912 = vrot.slane %v911, 4
      %v913 = vmax.f32 %v911, %v912
      %v914 = vrot.slane %v913, 2
      %v915 = vmax.f32 %v913, %v914
      %v916 = vrot.slane %v915, 1
      %v917 = vmax.f32 %v915, %v916
      %v918 = vmax.f32 %v876, %v877
      %v919 = vmax.f32 %v918, %v878
      %v920 = vmax.f32 %v919, %v879
      %v921 = vrot.slane %v920, 4
      %v922 = vmax.f32 %v920, %v921
      %v923 = vrot.slane %v922, 2
      %v924 = vmax.f32 %v922, %v923
      %v925 = vrot.slane %v924, 1
      %v926 = vmax.f32 %v924, %v925
      %v927 = vmax.f32 %v880, %v881
      %v928 = vmax.f32 %v927, %v882
      %v929 = vmax.f32 %v928, %v883
      %v930 = vrot.slane %v929, 4
      %v931 = vmax.f32 %v929, %v930
      %v932 = vrot.slane %v931, 2
      %v933 = vmax.f32 %v931, %v932
      %v934 = vrot.slane %v933, 1
      %v935 = vmax.f32 %v933, %v934
      %v936 = vmax.f32 %v884, %v885
      %v937 = vmax.f32 %v936, %v886
      %v938 = vmax.f32 %v937, %v887
      %v939 = vrot.slane %v938, 4
      %v940 = vmax.f32 %v938, %v939
      %v941 = vrot.slane %v940, 2
      %v942 = vmax.f32 %v940, %v941
      %v943 = vrot.slane %v942, 1
      %v944 = vmax.f32 %v942, %v943
      %v945 = vmax.f32 %v888, %v889
      %v946 = vmax.f32 %v945, %v890
      %v947 = vmax.f32 %v946, %v891
      %v948 = vrot.slane %v947, 4
      %v949 = vmax.f32 %v947, %v948
      %v950 = vrot.slane %v949, 2
      %v951 = vmax.f32 %v949, %v950
      %v952 = vrot.slane %v951, 1
      %v953 = vmax.f32 %v951, %v952
      %v954 = vmax.f32 %v892, %v893
      %v955 = vmax.f32 %v954, %v894
      %v956 = vmax.f32 %v955, %v895
      %v957 = vrot.slane %v956, 4
      %v958 = vmax.f32 %v956, %v957
      %v959 = vrot.slane %v958, 2
      %v960 = vmax.f32 %v958, %v959
      %v961 = vrot.slane %v960, 1
      %v962 = vmax.f32 %v960, %v961
      %v963 = vmax.f32 %v896, %v897
      %v964 = vmax.f32 %v963, %v898
      %v965 = vmax.f32 %v964, %v899
      %v966 = vrot.slane %v965, 4
      %v967 = vmax.f32 %v965, %v966
      %v968 = vrot.slane %v967, 2
      %v969 = vmax.f32 %v967, %v968
      %v970 = vrot.slane %v969, 1
      %v971 = vmax.f32 %v969, %v970
      %v972 = vld [vmem:[#allocation7] sm:$0xf]
      %v973 = vpack.c.bf16 %v908, %v908
      %v974 = vpack.c.bf16 %v917, %v917
      %v975 = vpack.c.bf16 %v926, %v926
      %v976 = vpack.c.bf16 %v935, %v935
      %v977 = vpack.c.bf16 %v944, %v944
      %v978 = vpack.c.bf16 %v953, %v953
      %v979 = vpack.c.bf16 %v962, %v962
      %v980 = vpack.c.bf16 %v971, %v971
      %v989 = vunpack.c.l.b16 %v973
      %v990 = vunpack.c.l.b16 %v974
      %v991 = vunpack.c.l.b16 %v975
      %v992 = vunpack.c.l.b16 %v976
      %v993 = vunpack.c.l.b16 %v977
      %v994 = vunpack.c.l.b16 %v978
      %v995 = vunpack.c.l.b16 %v979
      %v996 = vunpack.c.l.b16 %v980
      %v997 = vpack.c.b16 %v989, %v989
      %v998 = vpack.c.b16 %v990, %v990
      %v999 = vpack.c.b16 %v991, %v991
      %v1000 = vpack.c.b16 %v992, %v992
      %v1001 = vpack.c.b16 %v993, %v993
      %v1002 = vpack.c.b16 %v994, %v994
      %v1003 = vpack.c.b16 %v995, %v995
      %v1004 = vpack.c.b16 %v996, %v996
      %v1005 = vunpack.c.l.b16 %v997
      %v1006 = vunpack.c.l.b16 %v998
      %v1007 = vunpack.c.l.b16 %v999
      %v1008 = vunpack.c.l.b16 %v1000
      %v1009 = vunpack.c.l.b16 %v1001
      %v1010 = vunpack.c.l.b16 %v1002
      %v1011 = vunpack.c.l.b16 %v1003
      %v1012 = vunpack.c.l.b16 %v1004
      %vm1013 = vcmask 1041409
      %v1014 = vsel %vm1013, %v1006, %v1005
      %vm1015 = vcmask 1042434
      %v1016 = vsel %vm1015, %v1007, %v1014
      %vm1017 = vcmask 1043459
      %v1018 = vsel %vm1017, %v1008, %v1016
      %vm1019 = vcmask 1044484
      %v1020 = vsel %vm1019, %v1009, %v1018
      %vm1021 = vcmask 1045509
      %v1022 = vsel %vm1021, %v1010, %v1020
      %vm1023 = vcmask 1046534
      %v1024 = vsel %vm1023, %v1011, %v1022
      %vm1025 = vcmask 1047559
      %v1026 = vsel %vm1025, %v1012, %v1024
      %v1027 = vpack.c.b16 %v1026, %v1026
      %v1029 = vmax.bf16 %v972, %v1027
      %1030 = vst [vmem:[#allocation7] sm:$0xf] %v1029
    $region37: #{tpu_custom_call.1} parent=1 // pred_fallthru
      _
    // Predicated region
    $region38: #{tpu_custom_call.1} parent=1 // pred_check
      _
    $region39: #{tpu_custom_call.1} parent=1 // pred_check_branch
      %1032 = sbr.rel (0) target = $region41
    $region40: #{tpu_custom_call.1} parent=1 // pred_region
      %s1034 = ssub.s32 64, 64
      %1035 = vsyncadd [#allocation4], %s1034
      %s1037 = sshll.u32 [#allocation7], 4
      %s1038 = int_to_ptr.vmem [resolvable:$true] %s1037
      %1040 = dma.vmem_to_hbm [thread:$0]  %s1038, 64, %s4, [#allocation4]
    $region41: #{tpu_custom_call.1} parent=1 // pred_fallthru
      _
    // Predicated region
    $region42: #{tpu_custom_call.1} parent=1 // pred_check
      _
    $region43: #{tpu_custom_call.1} parent=1 // pred_check_branch
      %1042 = sbr.rel (0) target = $region45
    $region44: #{tpu_custom_call.1} parent=1 // pred_region
      %1043 = dma.done [#allocation4], 64
    $region45: #{tpu_custom_call.1} parent=1 // pred_fallthru
      _
    %1044 = vsyncpa [#allocation3], 1
    %1045 = vsyncpa [#allocation6], 1
    %1046 = vsyncpa [#allocation4], 1

</llo_original>
